<compile_context>
chip_gen: v6e
topology: v6e:2x2x1
jax: 0.10.0
libtpu: 0.0.40
codegen_flags: <defaults>
</compile_context>

<pallas_src>
import math
from functools import partial

import jax
import jax.numpy as jnp
import numpy as np
from jax import lax
from jax.experimental import pallas as pl
from jax.experimental.pallas import tpu as pltpu


# ---------------------------------------------------------------------------
# Kernel
# ---------------------------------------------------------------------------
def _resnet_block_kernel(x_ref, B0_ref, b0_ref, B1_ref, b1_ref, Bs_ref,
                         out_ref, apad_ref, hpad_ref):
    # x_ref   : (NB, H, W*Cin_p)         bf16  lane-dense input rows (channel minor)
    # B0_ref  : (3, W*Cin_p, W*Chid_p)   bf16  banded conv_0 weights, one per dy tap
    # b0_ref  : (1, W*Chid_p)            f32   conv_0 bias tiled over w
    # B1_ref  : (3, W*Chid_p, W*Cout_p)  bf16  banded conv_1 weights, PRE-SCALED by 0.1
    # b1_ref  : (1, W*Cout_p)            f32   conv_1 bias tiled over w, PRE-SCALED by 0.1
    # Bs_ref  : (W*Cin_p, W*Cout_p)      bf16  block-diagonal 1x1 shortcut weights
    # out_ref : (NB, H, W*Cout_p)        f32   lane-dense output slab
    # apad_ref: (H+2, W*Cin_p)           bf16  scratch: leaky_relu(x) with zero halo rows
    # hpad_ref: (H+2, W*Chid_p)          bf16  scratch: hidden activation with zero halo rows
    NB, H, WCi = x_ref.shape
    WCh = B0_ref.shape[2]

    # Halo rows (the conv's vertical zero padding).  2-row, packing-aligned zero
    # stores, once per grid step (NOT only at program_id==0: with a parallel /
    # core-parallel batch axis each TensorCore owns a private scratch).  Rows 1
    # and H are interior and are rewritten below before any read, so zeroing
    # them here is harmless.
    apad_ref[pl.ds(0, 2), :] = jnp.zeros((2, WCi), jnp.bfloat16)
    apad_ref[pl.ds(H, 2), :] = jnp.zeros((2, WCi), jnp.bfloat16)
    hpad_ref[pl.ds(0, 2), :] = jnp.zeros((2, WCh), jnp.bfloat16)
    hpad_ref[pl.ds(H, 2), :] = jnp.zeros((2, WCh), jnp.bfloat16)

    def conv3x3(center, pad_ref, w_ref):
        # Sum over the 3 vertical taps: (H, K) @ (K, N) banded matmuls with f32
        # accumulation.  The centre tap (dy=1) uses the live bf16 activation
        # value; the outer taps read the padded scratch at even (2-row aligned)
        # sublane offsets 0 and 2.
        # TODO(synk): on v7x, K-stack the 3 taps into a single matmul (MRB
        # in-place accumulation) once W*C is large enough to justify the
        # staging-copy traffic.
        acc = jnp.dot(center, w_ref[1], preferred_element_type=jnp.float32)
        acc = acc + jnp.dot(pad_ref[pl.ds(0, H), :], w_ref[0],
                            preferred_element_type=jnp.float32)
        acc = acc + jnp.dot(pad_ref[pl.ds(2, H), :], w_ref[2],
                            preferred_element_type=jnp.float32)
        return acc

    # Static unroll over the images folded into this grid step (NB is small at
    # these sizes).  TODO(synk): switch to lax.fori_loop for large NB to bound
    # vreg live ranges.
    for n in range(NB):
        x_n = x_ref[n]                                     # (H, W*Cin_p) bf16
        # leaky_relu(x, 0.2) in bf16 (native on v6e/v7x; on v5e compute in f32).
        a0 = jnp.where(x_n > 0, x_n, 0.2 * x_n)
        apad_ref[pl.ds(1, H), :] = a0

        # ---- conv_0 + bias + leaky_relu; restage hidden activation as bf16 ----
        h0 = conv3x3(a0, apad_ref, B0_ref) + b0_ref[...]   # (H, W*Chid_p) f32
        h_act = jnp.where(h0 > 0, h0, 0.2 * h0).astype(jnp.bfloat16)
        hpad_ref[pl.ds(1, H), :] = h_act

        # ---- conv_1 + bias (0.1 residual scale already folded in) ----
        dx = conv3x3(h_act, hpad_ref, B1_ref) + b1_ref[...]  # (H, W*Cout_p) f32

        # ---- learned 1x1 shortcut on the UN-activated input.  Re-read the ref
        #      so x_n is not held live across the conv pipeline. ----
        x_s = jnp.dot(x_ref[n], Bs_ref[...], preferred_element_type=jnp.float32)

        out_ref[n] = x_s + dx                              # lane-dense f32 store


# ---------------------------------------------------------------------------
# Host-side weight preparation (done ONCE per parameter set, cached in closure)
# ---------------------------------------------------------------------------
def _pad_channels(C, W):
    """Smallest C' >= C such that W*C' is a multiple of 128 (lane-dense slabs)."""
    step = 128 // math.gcd(W, 128)
    return -(-C // step) * step


def _banded_tap_weights(w_hwio, W):
    """(3,3,Ci,Co) HWIO conv weight -> (3, W*Ci, W*Co): one banded matrix per
    vertical tap dy, with the horizontal taps / horizontal zero padding folded
    into the band structure."""
    KH, KW, Ci, Co = w_hwio.shape
    assert KH == 3 and KW == 3, "kernel assumes 3x3 convs with padding=1"
    B = np.zeros((KH, W * Ci, W * Co), np.float32)
    for dy in range(KH):
        for dx in range(KW):
            for col in range(W):
                cu = col + dx - 1                          # un-padded input column
                if 0 <= cu < W:
                    B[dy, cu * Ci:(cu + 1) * Ci, col * Co:(col + 1) * Co] = w_hwio[dy, dx]
    return B


def _blockdiag_1x1(ws, W):
    """(Ci,Co) 1x1 conv weight -> block-diagonal (W*Ci, W*Co)."""
    Ci, Co = ws.shape
    Bs = np.zeros((W * Ci, W * Co), np.float32)
    for col in range(W):
        Bs[col * Ci:(col + 1) * Ci, col * Co:(col + 1) * Co] = ws
    return Bs


def make_resnet_block(w0, b0, w1, b1, ws=None, *, W, grid_steps=2):
    """Build a jit-compiled ResnetBlock forward for a fixed parameter set.

    w0: (3,3,fin,fhid) HWIO, b0: (fhid,), w1: (3,3,fhid,fout) HWIO,
    b1: (fout,) or None, ws: (fin,fout) 1x1 shortcut weight or None (identity;
    requires fin == fout).  Returned fwd(x_nhwc) maps (N,H,W,fin) -> (N,H,W,fout) f32.
    grid_steps: number of grid steps the batch is split into (>=2 keeps both
    v7x TensorCores busy; 1 = whole batch per step, fine on v5e/v6e).
    """
    w0 = np.asarray(w0, np.float32)
    w1 = np.asarray(w1, np.float32)
    b0 = np.asarray(b0, np.float32)
    _, _, fin, fhid = w0.shape
    fout = w1.shape[3]
    b1 = np.zeros((fout,), np.float32) if b1 is None else np.asarray(b1, np.float32)
    if ws is None:
        assert fin == fout, "identity shortcut requires fin == fout"
        ws = np.eye(fin, dtype=np.float32)
    ws = np.asarray(ws, np.float32)

    fin_p, fhid_p, fout_p = _pad_channels(fin, W), _pad_channels(fhid, W), _pad_channels(fout, W)

    # zero-pad channels so all slabs are 128-lane dense
    w0p = np.zeros((3, 3, fin_p, fhid_p), np.float32); w0p[:, :, :fin, :fhid] = w0
    w1p = np.zeros((3, 3, fhid_p, fout_p), np.float32); w1p[:, :, :fhid, :fout] = w1
    wsp = np.zeros((fin_p, fout_p), np.float32); wsp[:fin, :fout] = ws
    b0p = np.zeros((fhid_p,), np.float32); b0p[:fhid] = b0
    b1p = np.zeros((fout_p,), np.float32); b1p[:fout] = b1

    B0 = jnp.asarray(_banded_tap_weights(w0p, W), jnp.bfloat16)
    B1s = jnp.asarray(0.1 * _banded_tap_weights(w1p, W), jnp.bfloat16)   # 0.1 folded in
    Bs = jnp.asarray(_blockdiag_1x1(wsp, W), jnp.bfloat16)
    b0t = jnp.asarray(np.tile(b0p, W)[None, :], jnp.float32)             # (1, W*fhid_p)
    b1t = jnp.asarray(0.1 * np.tile(b1p, W)[None, :], jnp.float32)       # (1, W*fout_p), 0.1 folded in

    def fwd(x_nhwc):
        return _resnet_block_fwd(x_nhwc, B0, b0t, B1s, b1t, Bs,
                                 grid_steps=grid_steps, c_out=fout)
    return fwd


# ---------------------------------------------------------------------------
# pallas_call wrapper (NHWC / lane-dense boundary, no NCHW transposes inside)
# ---------------------------------------------------------------------------
@partial(jax.jit, static_argnames=("grid_steps", "c_out"))
def _resnet_block_fwd(x_nhwc, B0, b0t, B1s, b1t, Bs, *, grid_steps, c_out):
    N, H, W, Cin = x_nhwc.shape
    WCi, WCh = B0.shape[1], B0.shape[2]
    WCo = B1s.shape[2]
    Cin_p, Cout_p = WCi // W, WCo // W

    # lane-dense bf16 row slabs; zero-pad channels / batch as needed
    x = x_nhwc.astype(jnp.bfloat16)
    if Cin_p > Cin:
        x = jnp.pad(x, ((0, 0), (0, 0), (0, 0), (0, Cin_p - Cin)))
    steps = max(1, min(grid_steps, N))
    NB = -(-N // steps)                    # images folded into one grid step
    Npad = steps * NB
    if Npad > N:
        x = jnp.pad(x, ((0, Npad - N), (0, 0), (0, 0), (0, 0)))
    x_rows = x.reshape(Npad, H, W * Cin_p)

    out_rows = pl.pallas_call(
        _resnet_block_kernel,
        out_shape=jax.ShapeDtypeStruct((Npad, H, WCo), jnp.float32),
        grid_spec=pltpu.PrefetchScalarGridSpec(
            num_scalar_prefetch=0,
            grid=(steps,),
            in_specs=[
                pl.BlockSpec((NB, H, WCi), lambda s: (s, 0, 0)),
                # weights / biases: constant index_map -> fetched once, resident.
                # pl.Buffered(1) single-buffering deferred: ~0.25 MB total here;
                # it matters on v7x (64 MiB VMEM) only at realistic W*C.
                pl.BlockSpec((3, WCi, WCh), lambda s: (0, 0, 0)),
                pl.BlockSpec((1, WCh), lambda s: (0, 0)),
                pl.BlockSpec((3, WCh, WCo), lambda s: (0, 0, 0)),
                pl.BlockSpec((1, WCo), lambda s: (0, 0)),
                pl.BlockSpec((WCi, WCo), lambda s: (0, 0)),
            ],
            out_specs=pl.BlockSpec((NB, H, WCo), lambda s: (s, 0, 0)),
            scratch_shapes=[
                pltpu.VMEM((H + 2, WCi), jnp.bfloat16),   # padded leaky_relu(x)
                pltpu.VMEM((H + 2, WCh), jnp.bfloat16),   # padded hidden activation
            ],
        ),
        compiler_params=pltpu.CompilerParams(
            # Batch blocks are independent.  On v7x, switch this axis to
            # pltpu.CORE_PARALLEL to guarantee the 2-TensorCore split.
            dimension_semantics=("parallel",),
            vmem_limit_bytes=32 * 1024 * 1024,   # well under v7x's 64 MiB physical
        ),
    )(x_rows, B0, b0t, B1s, b1t, Bs)

    out = out_rows.reshape(Npad, H, W, Cout_p)
    return out[:N, :, :, :c_out]


# ---------------------------------------------------------------------------
# Pure-JAX reference (lax.conv), mirroring the kernel's bf16 MXU operands
# ---------------------------------------------------------------------------
def _reference_nhwc(x_nhwc, w0, b0, w1, b1, ws):
    bf = jnp.bfloat16
    dn = ('NHWC', 'HWIO', 'NHWC')

    def lrelu(v):
        return jnp.where(v > 0, v, 0.2 * v)

    x = x_nhwc.astype(bf)
    d0 = lax.conv_general_dilated(lrelu(x), jnp.asarray(w0, bf), (1, 1), 'SAME',
                                  dimension_numbers=dn,
                                  preferred_element_type=jnp.float32) + jnp.asarray(b0, jnp.float32)
    d1 = lax.conv_general_dilated(lrelu(d0).astype(bf), jnp.asarray(w1, bf), (1, 1), 'SAME',
                                  dimension_numbers=dn,
                                  preferred_element_type=jnp.float32) + jnp.asarray(b1, jnp.float32)
    xs = lax.conv_general_dilated(x, jnp.asarray(ws, bf)[None, None], (1, 1), 'SAME',
                                  dimension_numbers=dn,
                                  preferred_element_type=jnp.float32)
    return xs + 0.1 * d1


if __name__ == "__main__":
    # Module config: fin != fout -> learned_shortcut=True; fhidden = min(fin, fout).
    N, fin, fout, H, W = 2, 4, 8, 16, 16
    fhid = min(fin, fout)

    key = jax.random.PRNGKey(0)
    kx, k0, kb0, k1, kb1, ks, kx2 = jax.random.split(key, 7)

    w0 = jax.random.normal(k0, (3, 3, fin, fhid), jnp.float32) * 0.1     # conv_0 (HWIO)
    b0 = jax.random.normal(kb0, (fhid,), jnp.float32) * 0.1
    w1 = jax.random.normal(k1, (3, 3, fhid, fout), jnp.float32) * 0.1    # conv_1 (HWIO)
    b1 = jax.random.normal(kb1, (fout,), jnp.float32) * 0.1
    ws = jax.random.normal(ks, (fin, fout), jnp.float32) * 0.1           # conv_s (1x1, no bias)

    # Weight expansion is done once here and cached in the returned closure.
    block = make_resnet_block(w0, b0, w1, b1, ws, W=W, grid_steps=2)

    # --- primary config (N=2): PyTorch NCHW layout converted once at the demo
    #     boundary; the hot path is NHWC / lane-dense. ---
    x_nchw = jax.random.normal(kx, (N, fin, H, W), jnp.float32)
    x_nhwc = jnp.transpose(x_nchw, (0, 2, 3, 1))
    out = block(x_nhwc)
    jax.block_until_ready(out)

    ref = _reference_nhwc(x_nhwc, w0, b0, w1, b1, ws)
    np.testing.assert_allclose(np.asarray(out), np.asarray(ref), rtol=5e-3, atol=5e-3)
    assert out.shape == (N, H, W, fout)
    out_nchw = jnp.transpose(out, (0, 3, 1, 2))                          # back to NCHW if needed
    assert out_nchw.shape == (N, fout, H, W)

    # --- batch-folding path: 6 images -> 2 grid steps x 3 images per step ---
    x6 = jax.random.normal(kx2, (6, H, W, fin), jnp.float32)
    out6 = block(x6)
    jax.block_until_ready(out6)
    ref6 = _reference_nhwc(x6, w0, b0, w1, b1, ws)
    np.testing.assert_allclose(np.asarray(out6), np.asarray(ref6), rtol=5e-3, atol=5e-3)

    print("KERNEL_OK")
</pallas_src>

<mosaic_0001>
module attributes {stable_mosaic.version = 11 : i64} {
  func.func @_resnet_block_kernel(%arg0: i32, %arg1: memref<1x16x128xbf16, #tpu.memory_space<vmem>>, %arg2: memref<3x128x128xbf16, #tpu.memory_space<vmem>>, %arg3: memref<1x128xf32, #tpu.memory_space<vmem>>, %arg4: memref<3x128x128xbf16, #tpu.memory_space<vmem>>, %arg5: memref<1x128xf32, #tpu.memory_space<vmem>>, %arg6: memref<128x128xbf16, #tpu.memory_space<vmem>>, %arg7: memref<1x16x128xf32, #tpu.memory_space<vmem>>, %arg8: memref<18x128xbf16, #tpu.memory_space<vmem>>, %arg9: memref<18x128xbf16, #tpu.memory_space<vmem>>) attributes {dimension_semantics = [#tpu.dimension_semantics<parallel>], iteration_bounds = array<i64: 2>, scalar_prefetch = 0 : i64, scratch_operands = 2 : i64, tpu.core_type = #tpu.core_type<tc>, window_params = [{transform_indices = @transform_0, window_bounds = array<i64: 1, 16, 128>}, {pipeline_mode = #tpu.pipeline_mode<synchronous>, transform_indices = @transform_1, window_bounds = array<i64: 3, 128, 128>}, {pipeline_mode = #tpu.pipeline_mode<synchronous>, transform_indices = @transform_2, window_bounds = array<i64: 1, 128>}, {pipeline_mode = #tpu.pipeline_mode<synchronous>, transform_indices = @transform_3, window_bounds = array<i64: 3, 128, 128>}, {pipeline_mode = #tpu.pipeline_mode<synchronous>, transform_indices = @transform_4, window_bounds = array<i64: 1, 128>}, {pipeline_mode = #tpu.pipeline_mode<synchronous>, transform_indices = @transform_5, window_bounds = array<i64: 128, 128>}, {transform_indices = @transform_6, window_bounds = array<i64: 1, 16, 128>}]} {
    %cst = arith.constant 0.000000e+00 : bf16
    %0 = vector.broadcast %cst : bf16 to vector<2x128xbf16>
    %c0 = arith.constant 0 : index
    %c0_0 = arith.constant 0 : index
    %1 = vector.load %arg8[%c0, %c0_0] : memref<18x128xbf16, #tpu.memory_space<vmem>>, vector<2x128xbf16>
    tpu.vector_store %arg8[%c0, %c0_0], %0 {strides = array<i32>} : memref<18x128xbf16, #tpu.memory_space<vmem>>, vector<2x128xbf16>,
    %cst_1 = arith.constant 0.000000e+00 : bf16
    %2 = vector.broadcast %cst_1 : bf16 to vector<2x128xbf16>
    %c16 = arith.constant 16 : index
    %c0_2 = arith.constant 0 : index
    %3 = vector.load %arg8[%c16, %c0_2] : memref<18x128xbf16, #tpu.memory_space<vmem>>, vector<2x128xbf16>
    tpu.vector_store %arg8[%c16, %c0_2], %2 {strides = array<i32>} : memref<18x128xbf16, #tpu.memory_space<vmem>>, vector<2x128xbf16>,
    %cst_3 = arith.constant 0.000000e+00 : bf16
    %4 = vector.broadcast %cst_3 : bf16 to vector<2x128xbf16>
    %c0_4 = arith.constant 0 : index
    %c0_5 = arith.constant 0 : index
    %5 = vector.load %arg9[%c0_4, %c0_5] : memref<18x128xbf16, #tpu.memory_space<vmem>>, vector<2x128xbf16>
    tpu.vector_store %arg9[%c0_4, %c0_5], %4 {strides = array<i32>} : memref<18x128xbf16, #tpu.memory_space<vmem>>, vector<2x128xbf16>,
    %cst_6 = arith.constant 0.000000e+00 : bf16
    %6 = vector.broadcast %cst_6 : bf16 to vector<2x128xbf16>
    %c16_7 = arith.constant 16 : index
    %c0_8 = arith.constant 0 : index
    %7 = vector.load %arg9[%c16_7, %c0_8] : memref<18x128xbf16, #tpu.memory_space<vmem>>, vector<2x128xbf16>
    tpu.vector_store %arg9[%c16_7, %c0_8], %6 {strides = array<i32>} : memref<18x128xbf16, #tpu.memory_space<vmem>>, vector<2x128xbf16>,
    %c0_9 = arith.constant 0 : index
    %c0_10 = arith.constant 0 : index
    %c0_11 = arith.constant 0 : index
    %8 = vector.load %arg1[%c0_9, %c0_10, %c0_11] : memref<1x16x128xbf16, #tpu.memory_space<vmem>>, vector<1x16x128xbf16>
    %9 = vector.shape_cast %8 : vector<1x16x128xbf16> to vector<16x128xbf16>
    %cst_12 = arith.constant 0.000000e+00 : bf16
    %10 = vector.broadcast %cst_12 : bf16 to vector<16x128xbf16>
    %11 = arith.cmpf ogt, %9, %10 : vector<16x128xbf16>
    %cst_13 = arith.constant 2.001950e-01 : bf16
    %12 = vector.broadcast %cst_13 : bf16 to vector<16x128xbf16>
    %13 = arith.mulf %12, %9 : vector<16x128xbf16>
    %14 = arith.select %11, %9, %13 : vector<16x128xi1>, vector<16x128xbf16>
    %c1 = arith.constant 1 : index
    %c0_14 = arith.constant 0 : index
    %15 = vector.load %arg8[%c1, %c0_14] : memref<18x128xbf16, #tpu.memory_space<vmem>>, vector<16x128xbf16>
    tpu.vector_store %arg8[%c1, %c0_14], %14 {strides = array<i32>} : memref<18x128xbf16, #tpu.memory_space<vmem>>, vector<16x128xbf16>,
    %c1_15 = arith.constant 1 : index
    %c0_16 = arith.constant 0 : index
    %c0_17 = arith.constant 0 : index
    %16 = vector.load %arg2[%c1_15, %c0_16, %c0_17] : memref<3x128x128xbf16, #tpu.memory_space<vmem>>, vector<1x128x128xbf16>
    %17 = vector.shape_cast %16 : vector<1x128x128xbf16> to vector<128x128xbf16>
    %cst_18 = arith.constant dense<0.000000e+00> : vector<16x128xf32>
    %18 = tpu.matmul %14, %17, %cst_18 {dimension_numbers = #tpu.dot_dimension_numbers<[1], [0], [0], [1], [0, 0, 1, 1], [], []>} : vector<16x128xbf16>, vector<128x128xbf16>, vector<16x128xf32> -> vector<16x128xf32>
    %c0_19 = arith.constant 0 : index
    %c0_20 = arith.constant 0 : index
    %19 = vector.load %arg8[%c0_19, %c0_20] : memref<18x128xbf16, #tpu.memory_space<vmem>>, vector<16x128xbf16>
    %c0_21 = arith.constant 0 : index
    %c0_22 = arith.constant 0 : index
    %c0_23 = arith.constant 0 : index
    %20 = vector.load %arg2[%c0_21, %c0_22, %c0_23] : memref<3x128x128xbf16, #tpu.memory_space<vmem>>, vector<1x128x128xbf16>
    %21 = vector.shape_cast %20 : vector<1x128x128xbf16> to vector<128x128xbf16>
    %cst_24 = arith.constant dense<0.000000e+00> : vector<16x128xf32>
    %22 = tpu.matmul %19, %21, %cst_24 {dimension_numbers = #tpu.dot_dimension_numbers<[1], [0], [0], [1], [0, 0, 1, 1], [], []>} : vector<16x128xbf16>, vector<128x128xbf16>, vector<16x128xf32> -> vector<16x128xf32>
    %23 = arith.addf %18, %22 : vector<16x128xf32>
    %c2 = arith.constant 2 : index
    %c0_25 = arith.constant 0 : index
    %24 = vector.load %arg8[%c2, %c0_25] : memref<18x128xbf16, #tpu.memory_space<vmem>>, vector<16x128xbf16>
    %c2_26 = arith.constant 2 : index
    %c0_27 = arith.constant 0 : index
    %c0_28 = arith.constant 0 : index
    %25 = vector.load %arg2[%c2_26, %c0_27, %c0_28] : memref<3x128x128xbf16, #tpu.memory_space<vmem>>, vector<1x128x128xbf16>
    %26 = vector.shape_cast %25 : vector<1x128x128xbf16> to vector<128x128xbf16>
    %cst_29 = arith.constant dense<0.000000e+00> : vector<16x128xf32>
    %27 = tpu.matmul %24, %26, %cst_29 {dimension_numbers = #tpu.dot_dimension_numbers<[1], [0], [0], [1], [0, 0, 1, 1], [], []>} : vector<16x128xbf16>, vector<128x128xbf16>, vector<16x128xf32> -> vector<16x128xf32>
    %28 = arith.addf %23, %27 : vector<16x128xf32>
    %c0_30 = arith.constant 0 : index
    %c0_31 = arith.constant 0 : index
    %29 = vector.load %arg3[%c0_30, %c0_31] : memref<1x128xf32, #tpu.memory_space<vmem>>, vector<1x128xf32>
    %30 = vector.broadcast %29 : vector<1x128xf32> to vector<16x128xf32>
    %31 = arith.addf %28, %30 : vector<16x128xf32>
    %cst_32 = arith.constant 0.000000e+00 : f32
    %32 = vector.broadcast %cst_32 : f32 to vector<16x128xf32>
    %33 = arith.cmpf ogt, %31, %32 : vector<16x128xf32>
    %cst_33 = arith.constant 2.000000e-01 : f32
    %34 = vector.broadcast %cst_33 : f32 to vector<16x128xf32>
    %35 = arith.mulf %34, %31 : vector<16x128xf32>
    %36 = arith.select %33, %31, %35 : vector<16x128xi1>, vector<16x128xf32>
    %37 = arith.truncf %36 : vector<16x128xf32> to vector<16x128xbf16>
    %c1_34 = arith.constant 1 : index
    %c0_35 = arith.constant 0 : index
    %38 = vector.load %arg9[%c1_34, %c0_35] : memref<18x128xbf16, #tpu.memory_space<vmem>>, vector<16x128xbf16>
    tpu.vector_store %arg9[%c1_34, %c0_35], %37 {strides = array<i32>} : memref<18x128xbf16, #tpu.memory_space<vmem>>, vector<16x128xbf16>,
    %c1_36 = arith.constant 1 : index
    %c0_37 = arith.constant 0 : index
    %c0_38 = arith.constant 0 : index
    %39 = vector.load %arg4[%c1_36, %c0_37, %c0_38] : memref<3x128x128xbf16, #tpu.memory_space<vmem>>, vector<1x128x128xbf16>
    %40 = vector.shape_cast %39 : vector<1x128x128xbf16> to vector<128x128xbf16>
    %cst_39 = arith.constant dense<0.000000e+00> : vector<16x128xf32>
    %41 = tpu.matmul %37, %40, %cst_39 {dimension_numbers = #tpu.dot_dimension_numbers<[1], [0], [0], [1], [0, 0, 1, 1], [], []>} : vector<16x128xbf16>, vector<128x128xbf16>, vector<16x128xf32> -> vector<16x128xf32>
    %c0_40 = arith.constant 0 : index
    %c0_41 = arith.constant 0 : index
    %42 = vector.load %arg9[%c0_40, %c0_41] : memref<18x128xbf16, #tpu.memory_space<vmem>>, vector<16x128xbf16>
    %c0_42 = arith.constant 0 : index
    %c0_43 = arith.constant 0 : index
    %c0_44 = arith.constant 0 : index
    %43 = vector.load %arg4[%c0_42, %c0_43, %c0_44] : memref<3x128x128xbf16, #tpu.memory_space<vmem>>, vector<1x128x128xbf16>
    %44 = vector.shape_cast %43 : vector<1x128x128xbf16> to vector<128x128xbf16>
    %cst_45 = arith.constant dense<0.000000e+00> : vector<16x128xf32>
    %45 = tpu.matmul %42, %44, %cst_45 {dimension_numbers = #tpu.dot_dimension_numbers<[1], [0], [0], [1], [0, 0, 1, 1], [], []>} : vector<16x128xbf16>, vector<128x128xbf16>, vector<16x128xf32> -> vector<16x128xf32>
    %46 = arith.addf %41, %45 : vector<16x128xf32>
    %c2_46 = arith.constant 2 : index
    %c0_47 = arith.constant 0 : index
    %47 = vector.load %arg9[%c2_46, %c0_47] : memref<18x128xbf16, #tpu.memory_space<vmem>>, vector<16x128xbf16>
    %c2_48 = arith.constant 2 : index
    %c0_49 = arith.constant 0 : index
    %c0_50 = arith.constant 0 : index
    %48 = vector.load %arg4[%c2_48, %c0_49, %c0_50] : memref<3x128x128xbf16, #tpu.memory_space<vmem>>, vector<1x128x128xbf16>
    %49 = vector.shape_cast %48 : vector<1x128x128xbf16> to vector<128x128xbf16>
    %cst_51 = arith.constant dense<0.000000e+00> : vector<16x128xf32>
    %50 = tpu.matmul %47, %49, %cst_51 {dimension_numbers = #tpu.dot_dimension_numbers<[1], [0], [0], [1], [0, 0, 1, 1], [], []>} : vector<16x128xbf16>, vector<128x128xbf16>, vector<16x128xf32> -> vector<16x128xf32>
    %51 = arith.addf %46, %50 : vector<16x128xf32>
    %c0_52 = arith.constant 0 : index
    %c0_53 = arith.constant 0 : index
    %52 = vector.load %arg5[%c0_52, %c0_53] : memref<1x128xf32, #tpu.memory_space<vmem>>, vector<1x128xf32>
    %53 = vector.broadcast %52 : vector<1x128xf32> to vector<16x128xf32>
    %54 = arith.addf %51, %53 : vector<16x128xf32>
    %c0_54 = arith.constant 0 : index
    %c0_55 = arith.constant 0 : index
    %c0_56 = arith.constant 0 : index
    %55 = vector.load %arg1[%c0_54, %c0_55, %c0_56] : memref<1x16x128xbf16, #tpu.memory_space<vmem>>, vector<1x16x128xbf16>
    %56 = vector.shape_cast %55 : vector<1x16x128xbf16> to vector<16x128xbf16>
    %c0_57 = arith.constant 0 : index
    %c0_58 = arith.constant 0 : index
    %57 = vector.load %arg6[%c0_57, %c0_58] : memref<128x128xbf16, #tpu.memory_space<vmem>>, vector<128x128xbf16>
    %cst_59 = arith.constant dense<0.000000e+00> : vector<16x128xf32>
    %58 = tpu.matmul %56, %57, %cst_59 {dimension_numbers = #tpu.dot_dimension_numbers<[1], [0], [0], [1], [0, 0, 1, 1], [], []>} : vector<16x128xbf16>, vector<128x128xbf16>, vector<16x128xf32> -> vector<16x128xf32>
    %59 = arith.addf %58, %54 : vector<16x128xf32>
    %c0_60 = arith.constant 0 : index
    %c0_61 = arith.constant 0 : index
    %c0_62 = arith.constant 0 : index
    %60 = vector.load %arg7[%c0_60, %c0_61, %c0_62] : memref<1x16x128xf32, #tpu.memory_space<vmem>>, vector<1x16x128xf32>
    %61 = vector.shape_cast %60 : vector<1x16x128xf32> to vector<16x128xf32>
    %62 = vector.shape_cast %59 : vector<16x128xf32> to vector<1x16x128xf32>
    tpu.vector_store %arg7[%c0_60, %c0_61, %c0_62], %62 {strides = array<i32>} : memref<1x16x128xf32, #tpu.memory_space<vmem>>, vector<1x16x128xf32>,
    return
  }
  func.func @transform_0(%arg0: i32) -> (i32, i32, i32) {
    %c0_i32 = arith.constant 0 : i32
    %c0_i32_0 = arith.constant 0 : i32
    %c0_i32_1 = arith.constant 0 : i32
    return %arg0, %c0_i32, %c0_i32_0 : i32, i32, i32
  }
  func.func @transform_1(%arg0: i32) -> (i32, i32, i32) {
    %c0_i32 = arith.constant 0 : i32
    %c0_i32_0 = arith.constant 0 : i32
    %c0_i32_1 = arith.constant 0 : i32
    %c0_i32_2 = arith.constant 0 : i32
    return %c0_i32, %c0_i32_0, %c0_i32_1 : i32, i32, i32
  }
  func.func @transform_2(%arg0: i32) -> (i32, i32) {
    %c0_i32 = arith.constant 0 : i32
    %c0_i32_0 = arith.constant 0 : i32
    %c0_i32_1 = arith.constant 0 : i32
    return %c0_i32, %c0_i32_0 : i32, i32
  }
  func.func @transform_3(%arg0: i32) -> (i32, i32, i32) {
    %c0_i32 = arith.constant 0 : i32
    %c0_i32_0 = arith.constant 0 : i32
    %c0_i32_1 = arith.constant 0 : i32
    %c0_i32_2 = arith.constant 0 : i32
    return %c0_i32, %c0_i32_0, %c0_i32_1 : i32, i32, i32
  }
  func.func @transform_4(%arg0: i32) -> (i32, i32) {
    %c0_i32 = arith.constant 0 : i32
    %c0_i32_0 = arith.constant 0 : i32
    %c0_i32_1 = arith.constant 0 : i32
    return %c0_i32, %c0_i32_0 : i32, i32
  }
  func.func @transform_5(%arg0: i32) -> (i32, i32) {
    %c0_i32 = arith.constant 0 : i32
    %c0_i32_0 = arith.constant 0 : i32
    %c0_i32_1 = arith.constant 0 : i32
    return %c0_i32, %c0_i32_0 : i32, i32
  }
  func.func @transform_6(%arg0: i32) -> (i32, i32, i32) {
    %c0_i32 = arith.constant 0 : i32
    %c0_i32_0 = arith.constant 0 : i32
    %c0_i32_1 = arith.constant 0 : i32
    return %arg0, %c0_i32, %c0_i32_0 : i32, i32, i32
  }
}

</mosaic_0001>

<llo_original>
// kernel: _resnet_block_fwd.1
$region0: #{_resnet_block_fwd.1}
  #allocation0 [shape = 'u32[]', space=smem, size = 0x4, offset = 0x4, fixed_abs, tag = 'smem constant byte address 0x4 - core index']
  #allocation1 [shape = 'u32[144,128]{1,0:T(1,128)}', space=vmem, size = 0x12000, scoped, tag = 'internal scratch']
  #allocation2 [shape = 'bf16[18,128]{1,0:T(8,128)(2,1)}', space=vmem, size = 0x1800, scoped, tag = 'scratch operand']
  #allocation3 [shape = 'bf16[18,128]{1,0:T(8,128)(2,1)}', space=vmem, size = 0x1800, scoped, tag = 'scratch operand']
  %s0 = inlined_call_operand.vmem [shape: bf16[2,16,128], index: 0, kind: input, shape index: {}]
  %s1 = inlined_call_operand.vmem [shape: bf16[3,128,128], index: 1, kind: input, shape index: {}]
  %s2 = inlined_call_operand.vmem [shape: f32[1,128], index: 2, kind: input, shape index: {}]
  %s3 = inlined_call_operand.vmem [shape: bf16[3,128,128], index: 3, kind: input, shape index: {}]
  %s4 = inlined_call_operand.vmem [shape: f32[1,128], index: 4, kind: input, shape index: {}]
  %s5 = inlined_call_operand.vmem [shape: bf16[128,128], index: 5, kind: input, shape index: {}]
  %s6 = inlined_call_operand.vmem [shape: f32[2,16,128], index: 6, kind: output, shape index: {}]
  %s7 = sld [smem:[#allocation0]]
  $region57: #{_resnet_block_fwd.1} parent=0
    _
  %s9 = ssub.s32 1, %s7
  %s10 = scalar_select 0, %s9, %s7
  loop: start=0, step=1, limit=4
  $region2: #{_resnet_block_fwd.1} parent=0 // loop_pre_header
    _
  $region3: #{_resnet_block_fwd.1} parent=0 // loop_header
    %s12 = sphi 0, %s16
    %p13 = scmp.ge.s32.totalorder %s12, 4
    %s22 = sphi 0, %s24
    %s25 = sphi 0, %s22
    %s26 = sphi 0, %s25
    %s42 = sphi 0, %s26
    %s46 = sphi 0, %s46
    %s48 = sphi 0, %s46
    %s49 = sphi 0, %s48
    %s63 = sphi 0, %s49
    %s67 = sphi 0, %s67
    %s69 = sphi 0, %s67
    %s70 = sphi 0, %s69
    %s84 = sphi 0, %s70
    %s88 = sphi 0, %s88
    %s90 = sphi 0, %s88
    %s91 = sphi 0, %s90
    %s105 = sphi 0, %s91
    %s109 = sphi 0, %s109
    %s111 = sphi 0, %s109
    %s112 = sphi 0, %s111
    %s126 = sphi 0, %s112
    %s130 = sphi 0, %s130
    %s132 = sphi 0, %s130
    %s133 = sphi 0, %s132
    %s147 = sphi 0, %s133
    %s153 = sphi 0, %s155
    %s156 = sphi 0, %s153
    %s157 = sphi 0, %s156
    %s173 = sphi 0, %s157
  $region4: #{_resnet_block_fwd.1} parent=0 // loop_header_branch
    %15 = sbr.rel (%p13) target = $region8
  $region5: #{_resnet_block_fwd.1} parent=0 // loop_body
    %s17 = ssub.s32 %s12, 1
    %s18 = ssub.s32 %s12, 2
    %s19 = sadd.s32 %s12, 1
    %s20 = ssub.s32 %s12, %s19
    %p21 = scmp.eq.s32.totalorder %s20, 0
    %s23 = sadd.s32 %s22, 1
    %s24 = scalar_select %p21, %s22, %s23
    %p27 = pneg %p21
    %p28 = scmp.eq.s32.totalorder %s12, 1
    %p29 = por %p27, %p28
    %p30 = scmp.ne.s32.totalorder %s22, %s25
    %p31 = scmp.eq.s32.totalorder %s12, 0
    %p32 = por %p30, %p31
    %p33 = scmp.ne.s32.totalorder %s22, %s25
    %p34 = scmp.eq.s32.totalorder %s17, 1
    %p35 = por %p33, %p34
    %p36 = scmp.ne.s32.totalorder %s25, %s26
    %p37 = scmp.eq.s32.totalorder %s17, 0
    %p38 = por %p36, %p37
    %p39 = scmp.ne.s32.totalorder %s25, %s26
    %p40 = scmp.eq.s32.totalorder %s18, 1
    %p41 = por %p39, %p40
    %p43 = scmp.ne.s32.totalorder %s26, %s42
    %p44 = scmp.eq.s32.totalorder %s18, 0
    %p45 = por %p43, %p44
    %s47 = sadd.s32 %s46, 1
    %p50 = scmp.eq.s32.totalorder %s12, 1
    %p51 = scmp.ne.s32.totalorder %s46, %s48
    %p52 = scmp.eq.s32.totalorder %s12, 0
    %p53 = por %p51, %p52
    %p54 = scmp.ne.s32.totalorder %s46, %s48
    %p55 = scmp.eq.s32.totalorder %s17, 1
    %p56 = por %p54, %p55
    %p57 = scmp.ne.s32.totalorder %s48, %s49
    %p58 = scmp.eq.s32.totalorder %s17, 0
    %p59 = por %p57, %p58
    %p60 = scmp.ne.s32.totalorder %s48, %s49
    %p61 = scmp.eq.s32.totalorder %s18, 1
    %p62 = por %p60, %p61
    %p64 = scmp.ne.s32.totalorder %s49, %s63
    %p65 = scmp.eq.s32.totalorder %s18, 0
    %p66 = por %p64, %p65
    %s68 = sadd.s32 %s67, 1
    %p71 = scmp.eq.s32.totalorder %s12, 1
    %p72 = scmp.ne.s32.totalorder %s67, %s69
    %p73 = scmp.eq.s32.totalorder %s12, 0
    %p74 = por %p72, %p73
    %p75 = scmp.ne.s32.totalorder %s67, %s69
    %p76 = scmp.eq.s32.totalorder %s17, 1
    %p77 = por %p75, %p76
    %p78 = scmp.ne.s32.totalorder %s69, %s70
    %p79 = scmp.eq.s32.totalorder %s17, 0
    %p80 = por %p78, %p79
    %p81 = scmp.ne.s32.totalorder %s69, %s70
    %p82 = scmp.eq.s32.totalorder %s18, 1
    %p83 = por %p81, %p82
    %p85 = scmp.ne.s32.totalorder %s70, %s84
    %p86 = scmp.eq.s32.totalorder %s18, 0
    %p87 = por %p85, %p86
    %s89 = sadd.s32 %s88, 1
    %p92 = scmp.eq.s32.totalorder %s12, 1
    %p93 = scmp.ne.s32.totalorder %s88, %s90
    %p94 = scmp.eq.s32.totalorder %s12, 0
    %p95 = por %p93, %p94
    %p96 = scmp.ne.s32.totalorder %s88, %s90
    %p97 = scmp.eq.s32.totalorder %s17, 1
    %p98 = por %p96, %p97
    %p99 = scmp.ne.s32.totalorder %s90, %s91
    %p100 = scmp.eq.s32.totalorder %s17, 0
    %p101 = por %p99, %p100
    %p102 = scmp.ne.s32.totalorder %s90, %s91
    %p103 = scmp.eq.s32.totalorder %s18, 1
    %p104 = por %p102, %p103
    %p106 = scmp.ne.s32.totalorder %s91, %s105
    %p107 = scmp.eq.s32.totalorder %s18, 0
    %p108 = por %p106, %p107
    %s110 = sadd.s32 %s109, 1
    %p113 = scmp.eq.s32.totalorder %s12, 1
    %p114 = scmp.ne.s32.totalorder %s109, %s111
    %p115 = scmp.eq.s32.totalorder %s12, 0
    %p116 = por %p114, %p115
    %p117 = scmp.ne.s32.totalorder %s109, %s111
    %p118 = scmp.eq.s32.totalorder %s17, 1
    %p119 = por %p117, %p118
    %p120 = scmp.ne.s32.totalorder %s111, %s112
    %p121 = scmp.eq.s32.totalorder %s17, 0
    %p122 = por %p120, %p121
    %p123 = scmp.ne.s32.totalorder %s111, %s112
    %p124 = scmp.eq.s32.totalorder %s18, 1
    %p125 = por %p123, %p124
    %p127 = scmp.ne.s32.totalorder %s112, %s126
    %p128 = scmp.eq.s32.totalorder %s18, 0
    %p129 = por %p127, %p128
    %s131 = sadd.s32 %s130, 1
    %p134 = scmp.eq.s32.totalorder %s12, 1
    %p135 = scmp.ne.s32.totalorder %s130, %s132
    %p136 = scmp.eq.s32.totalorder %s12, 0
    %p137 = por %p135, %p136
    %p138 = scmp.ne.s32.totalorder %s130, %s132
    %p139 = scmp.eq.s32.totalorder %s17, 1
    %p140 = por %p138, %p139
    %p141 = scmp.ne.s32.totalorder %s132, %s133
    %p142 = scmp.eq.s32.totalorder %s17, 0
    %p143 = por %p141, %p142
    %p144 = scmp.ne.s32.totalorder %s132, %s133
    %p145 = scmp.eq.s32.totalorder %s18, 1
    %p146 = por %p144, %p145
    %p148 = scmp.ne.s32.totalorder %s133, %s147
    %p149 = scmp.eq.s32.totalorder %s18, 0
    %p150 = por %p148, %p149
    %s151 = ssub.s32 %s12, %s19
    %p152 = scmp.eq.s32.totalorder %s151, 0
    %s154 = sadd.s32 %s153, 1
    %s155 = scalar_select %p152, %s153, %s154
    %p158 = pneg %p152
    %p159 = scmp.eq.s32.totalorder %s12, 1
    %p160 = por %p158, %p159
    %p161 = scmp.ne.s32.totalorder %s153, %s156
    %p162 = scmp.eq.s32.totalorder %s12, 0
    %p163 = por %p161, %p162
    %p164 = scmp.ne.s32.totalorder %s153, %s156
    %p165 = scmp.eq.s32.totalorder %s17, 1
    %p166 = por %p164, %p165
    %p167 = scmp.ne.s32.totalorder %s156, %s157
    %p168 = scmp.eq.s32.totalorder %s17, 0
    %p169 = por %p167, %p168
    %p170 = scmp.ne.s32.totalorder %s156, %s157
    %p171 = scmp.eq.s32.totalorder %s18, 1
    %p172 = por %p170, %p171
    %p174 = scmp.ne.s32.totalorder %s157, %s173
    %p175 = scmp.eq.s32.totalorder %s18, 0
    %p176 = por %p174, %p175
    %p177 = scmp.le.s32.totalorder 1, %s12
    %p178 = scmp.lt.s32.totalorder %s12, 3
    %p179 = pnand %p177, %p178
    %p180 = pneg %p179
    // Predicated region
    $region9: #{_resnet_block_fwd.1} parent=5 // pred_check
      _
    $region10: #{_resnet_block_fwd.1} parent=5 // pred_check_branch
      %182 = sbr.rel (%p179) target = $region12
    $region11: #{_resnet_block_fwd.1} parent=5 // pred_region
      %s183 = ssub.s32 %s12, 1
      // Predicated region
      $region13: #{_resnet_block_fwd.1} parent=11 // pred_check
        %p184 = pneg %p59
      $region14: #{_resnet_block_fwd.1} parent=11 // pred_check_branch
        %186 = sbr.rel (%p184) target = $region16
      $region15: #{_resnet_block_fwd.1} parent=11 // pred_region
        _
      $region16: #{_resnet_block_fwd.1} parent=11 // pred_fallthru
        _
      // Predicated region
      $region17: #{_resnet_block_fwd.1} parent=11 // pred_check
        %p187 = pneg %p80
      $region18: #{_resnet_block_fwd.1} parent=11 // pred_check_branch
        %189 = sbr.rel (%p187) target = $region20
      $region19: #{_resnet_block_fwd.1} parent=11 // pred_region
        _
      $region20: #{_resnet_block_fwd.1} parent=11 // pred_fallthru
        _
      // Predicated region
      $region21: #{_resnet_block_fwd.1} parent=11 // pred_check
        %p190 = pneg %p101
      $region22: #{_resnet_block_fwd.1} parent=11 // pred_check_branch
        %192 = sbr.rel (%p190) target = $region24
      $region23: #{_resnet_block_fwd.1} parent=11 // pred_region
        _
      $region24: #{_resnet_block_fwd.1} parent=11 // pred_fallthru
        _
      // Predicated region
      $region25: #{_resnet_block_fwd.1} parent=11 // pred_check
        %p193 = pneg %p122
      $region26: #{_resnet_block_fwd.1} parent=11 // pred_check_branch
        %195 = sbr.rel (%p193) target = $region28
      $region27: #{_resnet_block_fwd.1} parent=11 // pred_region
        _
      $region28: #{_resnet_block_fwd.1} parent=11 // pred_fallthru
        _
      // Predicated region
      $region29: #{_resnet_block_fwd.1} parent=11 // pred_check
        %p196 = pneg %p143
      $region30: #{_resnet_block_fwd.1} parent=11 // pred_check_branch
        %198 = sbr.rel (%p196) target = $region32
      $region31: #{_resnet_block_fwd.1} parent=11 // pred_region
        _
      $region32: #{_resnet_block_fwd.1} parent=11 // pred_fallthru
        _
    $region12: #{_resnet_block_fwd.1} parent=5 // pred_fallthru
      _
    %p199 = scmp.lt.s32.totalorder %s12, 2
    // Predicated region
    $region33: #{_resnet_block_fwd.1} parent=5 // pred_check
      %p200 = pneg %p199
    $region34: #{_resnet_block_fwd.1} parent=5 // pred_check_branch
      %202 = sbr.rel (%p200) target = $region36
    $region35: #{_resnet_block_fwd.1} parent=5 // pred_region
      // Predicated region
      $region37: #{_resnet_block_fwd.1} parent=35 // pred_check
        %p203 = pneg %p32
      $region38: #{_resnet_block_fwd.1} parent=35 // pred_check_branch
        %205 = sbr.rel (%p203) target = $region40
      $region39: #{_resnet_block_fwd.1} parent=35 // pred_region
        %p206 = scmp.lt.s32.totalorder %s12, 1
        %s207 = scalar_select %p206, %s12, 1
        %s208 = smul.addr %s207, 2
        %s209 = smul.addr %s208, 4
        %s210 = scalar_lea.vmem %s0, %s209
      $region40: #{_resnet_block_fwd.1} parent=35 // pred_fallthru
        _
    $region36: #{_resnet_block_fwd.1} parent=5 // pred_fallthru
      _
    %p211 = scmp.le.s32.totalorder 1, %s12
    %p212 = scmp.lt.s32.totalorder %s12, 3
    %p213 = pnand %p211, %p212
    %p214 = pneg %p213
    // Predicated region
    $region41: #{_resnet_block_fwd.1} parent=5 // pred_check
      _
    $region42: #{_resnet_block_fwd.1} parent=5 // pred_check_branch
      %216 = sbr.rel (%p213) target = $region44
    $region43: #{_resnet_block_fwd.1} parent=5 // pred_region
      %s217 = ssub.s32 %s12, 1
      %p218 = scmp.lt.s32.totalorder %s17, 1
      %s219 = scalar_select %p218, %s17, 1
      %s220 = smul.addr %s219, 2
      %s221 = smul.addr %s220, 4
      %s222 = scalar_lea.vmem %s0, %s221
      %p223 = pneg %p38
      %p224 = pneg %p35
      %p225 = pneg %p59
      %p226 = pneg %p56
      %p227 = pneg %p80
      %p228 = pneg %p77
      %p229 = pneg %p101
      %p230 = pneg %p98
      %p231 = pneg %p122
      %p232 = pneg %p119
      %p233 = pneg %p143
      %p234 = pneg %p140
      %p235 = pneg %p169
      %p236 = pneg %p166
      %p237 = scmp.lt.s32.totalorder %s17, 1
      %s238 = scalar_select %p237, %s17, 1
      %s239 = smul.addr %s238, 2
      %s240 = smul.addr %s239, 8
      %s241 = scalar_lea.vmem %s6, %s240
      %p242 = scmp.lt.s32.totalorder %s17, 1
      %s243 = scalar_select %p242, %s17, 1
      %s244 = smul.addr %s243, 2
      %s245 = smul.addr %s244, 4
      %s246 = scalar_lea.vmem %s0, %s245
      %p247 = scmp.lt.s32.totalorder %s17, 1
      %s248 = scalar_select %p247, %s17, 1
      %s249 = smul.addr %s248, 2
      %s250 = smul.addr %s249, 8
      %s251 = scalar_lea.vmem %s6, %s250
      %254 = vst [vmem:[#allocation2] sm:$0x1] 0
      %255 = vst [vmem:[#allocation2 + $0x8] sm:$0x1] 0
      %256 = vst [vmem:[#allocation3] sm:$0x1] 0
      %257 = vst [vmem:[#allocation3 + $0x8] sm:$0x1] 0
      %v258 = vld [vmem:[%s246] sm:$0xf]
      %v259 = vld [vmem:[%s246 + $0x4] sm:$0xf]
      %vm260 = vcmp.gt.bf16.partialorder %v258, 0
      %vm261 = vcmp.gt.bf16.partialorder %v259, 0
      %v262 = vmul.bf16 %v258, 1045249613
      %v263 = vmul.bf16 %v259, 1045249613
      %v264 = vsel %vm260, %v258, %v262
      %v265 = vsel %vm261, %v259, %v263
      %vm266 = vsmask.f32 256
      %vm267 = vsmask.f32 4368
      %vm268 = vmor %vm266, %vm267
      %v270 = vshrl.u32 %v264, 16
      %v272 = vrot.slane %v270, 7
      %v273 = vshll.u32 %v264, 16
      %v275 = vor.u32 %v272, %v273
      %v276 = vrot.slane %v272, 4
      %v278 = vshrl.u32 %v265, 16
      %v280 = vrot.slane %v278, 7
      %v281 = vshll.u32 %v265, 16
      %v283 = vor.u32 %v280, %v281
      %v284 = vsel %vm268, %v276, %v283
      %v285 = vrot.slane %v280, 4
      %vm289 = vcmask 1043456
      %vm290 = vsmask.f32 7938
      %vm291 = vmand %vm289, %vm290
      %v292 = vld [vmem:[#allocation2] sm:$0xf]
      %v293 = vsel %vm291, %v275, %v292
      %294 = vst [vmem:[#allocation2] sm:$0xf] %v293
      %295 = vst [vmem:[#allocation2 + $0x4] sm:$0xf] %v284
      %vm296 = vcmask 1040384
      %vm297 = vmand %vm296, %vm266
      %v298 = vld [vmem:[#allocation2 + $0x8] sm:$0x1]
      %v299 = vsel %vm297, %v285, %v298
      %300 = vst [vmem:[#allocation2 + $0x8] sm:$0x1] %v299
      %s301 = scalar_lea.vmem %s1, 64
      %v302 = vld [vmem:[%s301] sm:$0xf]
      %v303 = vld [vmem:[%s301 + $0x4] sm:$0xf]
      %v304 = vld [vmem:[%s301 + $0x8] sm:$0xf]
      %v305 = vld [vmem:[%s301 + $0xc] sm:$0xf]
      %v306 = vld [vmem:[%s301 + $0x10] sm:$0xf]
      %v307 = vld [vmem:[%s301 + $0x14] sm:$0xf]
      %v308 = vld [vmem:[%s301 + $0x18] sm:$0xf]
      %v309 = vld [vmem:[%s301 + $0x1c] sm:$0xf]
      %v310 = vld [vmem:[%s301 + $0x20] sm:$0xf]
      %v311 = vld [vmem:[%s301 + $0x24] sm:$0xf]
      %v312 = vld [vmem:[%s301 + $0x28] sm:$0xf]
      %v313 = vld [vmem:[%s301 + $0x2c] sm:$0xf]
      %v314 = vld [vmem:[%s301 + $0x30] sm:$0xf]
      %v315 = vld [vmem:[%s301 + $0x34] sm:$0xf]
      %v316 = vld [vmem:[%s301 + $0x38] sm:$0xf]
      %v317 = vld [vmem:[%s301 + $0x3c] sm:$0xf]
      %v318 = vld [vmem:[#allocation2] sm:$0xf]
      %v319 = vld [vmem:[#allocation2 + $0x4] sm:$0xf]
      %v320 = vld [vmem:[%s1] sm:$0xf]
      %v321 = vld [vmem:[%s1 + $0x4] sm:$0xf]
      %v322 = vld [vmem:[%s1 + $0x8] sm:$0xf]
      %v323 = vld [vmem:[%s1 + $0xc] sm:$0xf]
      %v324 = vld [vmem:[%s1 + $0x10] sm:$0xf]
      %v325 = vld [vmem:[%s1 + $0x14] sm:$0xf]
      %v326 = vld [vmem:[%s1 + $0x18] sm:$0xf]
      %v327 = vld [vmem:[%s1 + $0x1c] sm:$0xf]
      %v328 = vld [vmem:[%s1 + $0x20] sm:$0xf]
      %v329 = vld [vmem:[%s1 + $0x24] sm:$0xf]
      %v330 = vld [vmem:[%s1 + $0x28] sm:$0xf]
      %v331 = vld [vmem:[%s1 + $0x2c] sm:$0xf]
      %v332 = vld [vmem:[%s1 + $0x30] sm:$0xf]
      %v333 = vld [vmem:[%s1 + $0x34] sm:$0xf]
      %v334 = vld [vmem:[%s1 + $0x38] sm:$0xf]
      %v335 = vld [vmem:[%s1 + $0x3c] sm:$0xf]
      %v338 = vunpack.c.l.b16 %v318
      %v339 = vunpack.c.l.b16 %v319
      %v340 = vpack.c.b16 %v339, %v338
      %v358 = vunpack.c.l.b16 %v320
      %v359 = vunpack.c.l.b16 %v321
      %v360 = vunpack.c.l.b16 %v322
      %v361 = vunpack.c.l.b16 %v323
      %v362 = vunpack.c.l.b16 %v324
      %v363 = vunpack.c.l.b16 %v325
      %v364 = vunpack.c.l.b16 %v326
      %v365 = vunpack.c.l.b16 %v327
      %v366 = vunpack.c.l.b16 %v328
      %v367 = vunpack.c.l.b16 %v329
      %v368 = vunpack.c.l.b16 %v330
      %v369 = vunpack.c.l.b16 %v331
      %v370 = vunpack.c.l.b16 %v332
      %v371 = vunpack.c.l.b16 %v333
      %v372 = vunpack.c.l.b16 %v334
      %v373 = vunpack.c.l.b16 %v335
      %v374 = vpack.c.b16 %v359, %v358
      %v375 = vpack.c.b16 %v361, %v360
      %v376 = vpack.c.b16 %v363, %v362
      %v377 = vpack.c.b16 %v365, %v364
      %v378 = vpack.c.b16 %v367, %v366
      %v379 = vpack.c.b16 %v369, %v368
      %v380 = vpack.c.b16 %v371, %v370
      %v381 = vpack.c.b16 %v373, %v372
      %390 = vmatprep.subr.bf16.mxu0 0
      %391 = vmatpush1.bf16.msra.mxu0 %v381
      %392 = vmatprep.subr.bf16.mxu0 0
      %393 = vmatpush1.bf16.msra.mxu0 %v380
      %394 = vmatprep.subr.bf16.mxu0 0
      %395 = vmatpush1.bf16.msra.mxu0 %v379
      %396 = vmatprep.subr.bf16.mxu0 0
      %397 = vmatpush1.bf16.msra.mxu0 %v378
      %398 = vmatprep.subr.bf16.mxu0 0
      %399 = vmatpush1.bf16.msra.mxu0 %v377
      %400 = vmatprep.subr.bf16.mxu0 0
      %401 = vmatpush1.bf16.msra.mxu0 %v376
      %402 = vmatprep.subr.bf16.mxu0 0
      %403 = vmatpush1.bf16.msra.mxu0 %v375
      %404 = vmatprep.subr.bf16.mxu0 0
      %405 = vmatpush1.bf16.msra.mxu0 %v374
      %406 = vmatprep.subr.bf16.mxu0 0
      %407 = vmatpush2.bf16.msra.mxu0 0
      %408 = vmatprep.subr.bf16.mxu0 0
      %409 = vmatpush2.bf16.msra.mxu0 0
      %410 = vmatprep.subr.bf16.mxu0 0
      %411 = vmatpush2.bf16.msra.mxu0 0
      %412 = vmatprep.subr.bf16.mxu0 0
      %413 = vmatpush2.bf16.msra.mxu0 0
      %414 = vmatprep.subr.bf16.mxu0 0
      %415 = vmatpush2.bf16.msra.mxu0 0
      %416 = vmatprep.subr.bf16.mxu0 0
      %417 = vmatpush2.bf16.msra.mxu0 0
      %418 = vmatprep.subr.bf16.mxu0 0
      %419 = vmatpush2.bf16.msra.mxu0 0
      %420 = vmatprep.subr.bf16.mxu0 0
      %421 = vmatpush2.bf16.msra.mxu0 0
      %422 = vmatprep.mubr.bf16.mxu0 0
      %423 = vmatmul.mubr.bf16.gmra.mxu0 %v340
      %v424 = vpop.f32.mrf.mxu0
      %v425 = vadd.f32 0.0, %v424
      %v426 = vpop.f32.mrf.mxu0
      %v427 = vpop.f32.mrf.mxu0
      %v428 = vadd.f32 0.0, %v427
      %v429 = vpop.f32.mrf.mxu0
      %430 = vdwg.mxu0
      %v433 = vunpack.c.l.b16 %v264
      %v434 = vunpack.c.l.b16 %v265
      %v435 = vpack.c.b16 %v434, %v433
      %v453 = vunpack.c.l.b16 %v302
      %v454 = vunpack.c.l.b16 %v303
      %v455 = vunpack.c.l.b16 %v304
      %v456 = vunpack.c.l.b16 %v305
      %v457 = vunpack.c.l.b16 %v306
      %v458 = vunpack.c.l.b16 %v307
      %v459 = vunpack.c.l.b16 %v308
      %v460 = vunpack.c.l.b16 %v309
      %v461 = vunpack.c.l.b16 %v310
      %v462 = vunpack.c.l.b16 %v311
      %v463 = vunpack.c.l.b16 %v312
      %v464 = vunpack.c.l.b16 %v313
      %v465 = vunpack.c.l.b16 %v314
      %v466 = vunpack.c.l.b16 %v315
      %v467 = vunpack.c.l.b16 %v316
      %v468 = vunpack.c.l.b16 %v317
      %v469 = vpack.c.b16 %v454, %v453
      %v470 = vpack.c.b16 %v456, %v455
      %v471 = vpack.c.b16 %v458, %v457
      %v472 = vpack.c.b16 %v460, %v459
      %v473 = vpack.c.b16 %v462, %v461
      %v474 = vpack.c.b16 %v464, %v463
      %v475 = vpack.c.b16 %v466, %v465
      %v476 = vpack.c.b16 %v468, %v467
      %485 = vmatprep.subr.bf16.mxu0 0
      %486 = vmatpush1.bf16.msra.mxu0 %v476
      %487 = vmatprep.subr.bf16.mxu0 0
      %488 = vmatpush1.bf16.msra.mxu0 %v475
      %489 = vmatprep.subr.bf16.mxu0 0
      %490 = vmatpush1.bf16.msra.mxu0 %v474
      %491 = vmatprep.subr.bf16.mxu0 0
      %492 = vmatpush1.bf16.msra.mxu0 %v473
      %493 = vmatprep.subr.bf16.mxu0 0
      %494 = vmatpush1.bf16.msra.mxu0 %v472
      %495 = vmatprep.subr.bf16.mxu0 0
      %496 = vmatpush1.bf16.msra.mxu0 %v471
      %497 = vmatprep.subr.bf16.mxu0 0
      %498 = vmatpush1.bf16.msra.mxu0 %v470
      %499 = vmatprep.subr.bf16.mxu0 0
      %500 = vmatpush1.bf16.msra.mxu0 %v469
      %501 = vmatprep.subr.bf16.mxu0 0
      %502 = vmatpush2.bf16.msra.mxu0 0
      %503 = vmatprep.subr.bf16.mxu0 0
      %504 = vmatpush2.bf16.msra.mxu0 0
      %505 = vmatprep.subr.bf16.mxu0 0
      %506 = vmatpush2.bf16.msra.mxu0 0
      %507 = vmatprep.subr.bf16.mxu0 0
      %508 = vmatpush2.bf16.msra.mxu0 0
      %509 = vmatprep.subr.bf16.mxu0 0
      %510 = vmatpush2.bf16.msra.mxu0 0
      %511 = vmatprep.subr.bf16.mxu0 0
      %512 = vmatpush2.bf16.msra.mxu0 0
      %513 = vmatprep.subr.bf16.mxu0 0
      %514 = vmatpush2.bf16.msra.mxu0 0
      %515 = vmatprep.subr.bf16.mxu0 0
      %516 = vmatpush2.bf16.msra.mxu0 0
      %517 = vmatprep.mubr.bf16.mxu0 0
      %518 = vmatmul.mubr.bf16.gmra.mxu0 %v435
      %v519 = vpop.f32.mrf.mxu0
      %v520 = vadd.f32 %v425, %v519
      %v521 = vpop.f32.mrf.mxu0
      %v522 = vpop.f32.mrf.mxu0
      %v523 = vadd.f32 %v428, %v522
      %v524 = vpop.f32.mrf.mxu0
      %525 = vdwg.mxu0
      %v526 = vld [vmem:[#allocation2] sm:$0xe]
      %v527 = vld [vmem:[#allocation2 + $0x4] sm:$0xf]
      %v528 = vld [vmem:[#allocation2 + $0x8] sm:$0x1]
      %s529 = scalar_lea.vmem %s1, 128
      %v530 = vld [vmem:[%s529] sm:$0xf]
      %v531 = vld [vmem:[%s529 + $0x4] sm:$0xf]
      %v532 = vld [vmem:[%s529 + $0x8] sm:$0xf]
      %v533 = vld [vmem:[%s529 + $0xc] sm:$0xf]
      %v534 = vld [vmem:[%s529 + $0x10] sm:$0xf]
      %v535 = vld [vmem:[%s529 + $0x14] sm:$0xf]
      %v536 = vld [vmem:[%s529 + $0x18] sm:$0xf]
      %v537 = vld [vmem:[%s529 + $0x1c] sm:$0xf]
      %v538 = vld [vmem:[%s529 + $0x20] sm:$0xf]
      %v539 = vld [vmem:[%s529 + $0x24] sm:$0xf]
      %v540 = vld [vmem:[%s529 + $0x28] sm:$0xf]
      %v541 = vld [vmem:[%s529 + $0x2c] sm:$0xf]
      %v542 = vld [vmem:[%s529 + $0x30] sm:$0xf]
      %v543 = vld [vmem:[%s529 + $0x34] sm:$0xf]
      %v544 = vld [vmem:[%s529 + $0x38] sm:$0xf]
      %v545 = vld [vmem:[%s529 + $0x3c] sm:$0xf]
      %v549 = vunpack.c.l.b16 %v526
      %v550 = vunpack.c.l.b16 %v527
      %v551 = vunpack.c.l.b16 %v528
      %v552 = vpack.c.b16 %v550, %v549
      %v553 = vpack.c.b16 %v551, %v551
      %vm554 = vcmask 1046528
      %v555 = vrot.slane %v552, 1
      %v556 = vrot.slane %v553, 1
      %v557 = vsel %vm554, %v555, %v556
      %v575 = vunpack.c.l.b16 %v530
      %v576 = vunpack.c.l.b16 %v531
      %v577 = vunpack.c.l.b16 %v532
      %v578 = vunpack.c.l.b16 %v533
      %v579 = vunpack.c.l.b16 %v534
      %v580 = vunpack.c.l.b16 %v535
      %v581 = vunpack.c.l.b16 %v536
      %v582 = vunpack.c.l.b16 %v537
      %v583 = vunpack.c.l.b16 %v538
      %v584 = vunpack.c.l.b16 %v539
      %v585 = vunpack.c.l.b16 %v540
      %v586 = vunpack.c.l.b16 %v541
      %v587 = vunpack.c.l.b16 %v542
      %v588 = vunpack.c.l.b16 %v543
      %v589 = vunpack.c.l.b16 %v544
      %v590 = vunpack.c.l.b16 %v545
      %v591 = vpack.c.b16 %v576, %v575
      %v592 = vpack.c.b16 %v578, %v577
      %v593 = vpack.c.b16 %v580, %v579
      %v594 = vpack.c.b16 %v582, %v581
      %v595 = vpack.c.b16 %v584, %v583
      %v596 = vpack.c.b16 %v586, %v585
      %v597 = vpack.c.b16 %v588, %v587
      %v598 = vpack.c.b16 %v590, %v589
      %607 = vmatprep.subr.bf16.mxu0 0
      %608 = vmatpush1.bf16.msra.mxu0 %v598
      %609 = vmatprep.subr.bf16.mxu0 0
      %610 = vmatpush1.bf16.msra.mxu0 %v597
      %611 = vmatprep.subr.bf16.mxu0 0
      %612 = vmatpush1.bf16.msra.mxu0 %v596
      %613 = vmatprep.subr.bf16.mxu0 0
      %614 = vmatpush1.bf16.msra.mxu0 %v595
      %615 = vmatprep.subr.bf16.mxu0 0
      %616 = vmatpush1.bf16.msra.mxu0 %v594
      %617 = vmatprep.subr.bf16.mxu0 0
      %618 = vmatpush1.bf16.msra.mxu0 %v593
      %619 = vmatprep.subr.bf16.mxu0 0
      %620 = vmatpush1.bf16.msra.mxu0 %v592
      %621 = vmatprep.subr.bf16.mxu0 0
      %622 = vmatpush1.bf16.msra.mxu0 %v591
      %623 = vmatprep.subr.bf16.mxu0 0
      %624 = vmatpush2.bf16.msra.mxu0 0
      %625 = vmatprep.subr.bf16.mxu0 0
      %626 = vmatpush2.bf16.msra.mxu0 0
      %627 = vmatprep.subr.bf16.mxu0 0
      %628 = vmatpush2.bf16.msra.mxu0 0
      %629 = vmatprep.subr.bf16.mxu0 0
      %630 = vmatpush2.bf16.msra.mxu0 0
      %631 = vmatprep.subr.bf16.mxu0 0
      %632 = vmatpush2.bf16.msra.mxu0 0
      %633 = vmatprep.subr.bf16.mxu0 0
      %634 = vmatpush2.bf16.msra.mxu0 0
      %635 = vmatprep.subr.bf16.mxu0 0
      %636 = vmatpush2.bf16.msra.mxu0 0
      %637 = vmatprep.subr.bf16.mxu0 0
      %638 = vmatpush2.bf16.msra.mxu0 0
      %639 = vmatprep.mubr.bf16.mxu0 0
      %640 = vmatmul.mubr.bf16.gmra.mxu0 %v557
      %v641 = vpop.f32.mrf.mxu0
      %v642 = vadd.f32 0.0, %v641
      %v643 = vpop.f32.mrf.mxu0
      %v644 = vpop.f32.mrf.mxu0
      %v645 = vadd.f32 0.0, %v644
      %v646 = vpop.f32.mrf.mxu0
      %647 = vdwg.mxu0
      %v648 = vadd.f32 %v520, %v642
      %v649 = vadd.f32 %v523, %v645
      %v650 = vld [vmem:[%s2] sm:$0x1]
      %v652 = vlaneseq
      %v653 = vshrl.u32 %v652, 7
      %v654 = vsub.s32 0, %v653
      %v655 = vrot.slane %v650, %v654
      %v657 = vadd.f32 %v648, %v655
      %v658 = vadd.f32 %v649, %v655
      %vm659 = vcmp.gt.f32.partialorder %v657, 0.0
      %vm660 = vcmp.gt.f32.partialorder %v658, 0.0
      %v661 = vmul.f32 %v657, 0.2
      %v662 = vmul.f32 %v658, 0.2
      %v663 = vsel %vm659, %v657, %v661
      %v664 = vsel %vm660, %v658, %v662
      %v665 = vpack.c.bf16 %v664, %v663
      %v667 = vunpack.c.l.b16 %v665
      %v668 = vunpack.c.h.b16 %v665
      %v669 = vpack.c.b16 %v667, %v667
      %v670 = vpack.c.b16 %v668, %v668
      %v672 = vshrl.u32 %v669, 16
      %v674 = vrot.slane %v672, 7
      %v675 = vshll.u32 %v669, 16
      %v677 = vor.u32 %v674, %v675
      %v678 = vrot.slane %v674, 4
      %v680 = vshrl.u32 %v670, 16
      %v682 = vrot.slane %v680, 7
      %v683 = vshll.u32 %v670, 16
      %v685 = vor.u32 %v682, %v683
      %v686 = vsel %vm268, %v678, %v685
      %v687 = vrot.slane %v682, 4
      %v691 = vld [vmem:[#allocation3] sm:$0xf]
      %v692 = vsel %vm291, %v677, %v691
      %693 = vst [vmem:[#allocation3] sm:$0xf] %v692
      %694 = vst [vmem:[#allocation3 + $0x4] sm:$0xf] %v686
      %v695 = vld [vmem:[#allocation3 + $0x8] sm:$0x1]
      %v696 = vsel %vm297, %v687, %v695
      %697 = vst [vmem:[#allocation3 + $0x8] sm:$0x1] %v696
      %s698 = scalar_lea.vmem %s3, 64
      %v699 = vld [vmem:[%s698] sm:$0xf]
      %v700 = vld [vmem:[%s698 + $0x4] sm:$0xf]
      %v701 = vld [vmem:[%s698 + $0x8] sm:$0xf]
      %v702 = vld [vmem:[%s698 + $0xc] sm:$0xf]
      %v703 = vld [vmem:[%s698 + $0x10] sm:$0xf]
      %v704 = vld [vmem:[%s698 + $0x14] sm:$0xf]
      %v705 = vld [vmem:[%s698 + $0x18] sm:$0xf]
      %v706 = vld [vmem:[%s698 + $0x1c] sm:$0xf]
      %v707 = vld [vmem:[%s698 + $0x20] sm:$0xf]
      %v708 = vld [vmem:[%s698 + $0x24] sm:$0xf]
      %v709 = vld [vmem:[%s698 + $0x28] sm:$0xf]
      %v710 = vld [vmem:[%s698 + $0x2c] sm:$0xf]
      %v711 = vld [vmem:[%s698 + $0x30] sm:$0xf]
      %v712 = vld [vmem:[%s698 + $0x34] sm:$0xf]
      %v713 = vld [vmem:[%s698 + $0x38] sm:$0xf]
      %v714 = vld [vmem:[%s698 + $0x3c] sm:$0xf]
      %v715 = vld [vmem:[#allocation3] sm:$0xf]
      %v716 = vld [vmem:[#allocation3 + $0x4] sm:$0xf]
      %v717 = vld [vmem:[%s3] sm:$0xf]
      %v718 = vld [vmem:[%s3 + $0x4] sm:$0xf]
      %v719 = vld [vmem:[%s3 + $0x8] sm:$0xf]
      %v720 = vld [vmem:[%s3 + $0xc] sm:$0xf]
      %v721 = vld [vmem:[%s3 + $0x10] sm:$0xf]
      %v722 = vld [vmem:[%s3 + $0x14] sm:$0xf]
      %v723 = vld [vmem:[%s3 + $0x18] sm:$0xf]
      %v724 = vld [vmem:[%s3 + $0x1c] sm:$0xf]
      %v725 = vld [vmem:[%s3 + $0x20] sm:$0xf]
      %v726 = vld [vmem:[%s3 + $0x24] sm:$0xf]
      %v727 = vld [vmem:[%s3 + $0x28] sm:$0xf]
      %v728 = vld [vmem:[%s3 + $0x2c] sm:$0xf]
      %v729 = vld [vmem:[%s3 + $0x30] sm:$0xf]
      %v730 = vld [vmem:[%s3 + $0x34] sm:$0xf]
      %v731 = vld [vmem:[%s3 + $0x38] sm:$0xf]
      %v732 = vld [vmem:[%s3 + $0x3c] sm:$0xf]
      %v735 = vunpack.c.l.b16 %v715
      %v736 = vunpack.c.l.b16 %v716
      %v737 = vpack.c.b16 %v736, %v735
      %v755 = vunpack.c.l.b16 %v717
      %v756 = vunpack.c.l.b16 %v718
      %v757 = vunpack.c.l.b16 %v719
      %v758 = vunpack.c.l.b16 %v720
      %v759 = vunpack.c.l.b16 %v721
      %v760 = vunpack.c.l.b16 %v722
      %v761 = vunpack.c.l.b16 %v723
      %v762 = vunpack.c.l.b16 %v724
      %v763 = vunpack.c.l.b16 %v725
      %v764 = vunpack.c.l.b16 %v726
      %v765 = vunpack.c.l.b16 %v727
      %v766 = vunpack.c.l.b16 %v728
      %v767 = vunpack.c.l.b16 %v729
      %v768 = vunpack.c.l.b16 %v730
      %v769 = vunpack.c.l.b16 %v731
      %v770 = vunpack.c.l.b16 %v732
      %v771 = vpack.c.b16 %v756, %v755
      %v772 = vpack.c.b16 %v758, %v757
      %v773 = vpack.c.b16 %v760, %v759
      %v774 = vpack.c.b16 %v762, %v761
      %v775 = vpack.c.b16 %v764, %v763
      %v776 = vpack.c.b16 %v766, %v765
      %v777 = vpack.c.b16 %v768, %v767
      %v778 = vpack.c.b16 %v770, %v769
      %787 = vmatprep.subr.bf16.mxu0 0
      %788 = vmatpush1.bf16.msra.mxu0 %v778
      %789 = vmatprep.subr.bf16.mxu0 0
      %790 = vmatpush1.bf16.msra.mxu0 %v777
      %791 = vmatprep.subr.bf16.mxu0 0
      %792 = vmatpush1.bf16.msra.mxu0 %v776
      %793 = vmatprep.subr.bf16.mxu0 0
      %794 = vmatpush1.bf16.msra.mxu0 %v775
      %795 = vmatprep.subr.bf16.mxu0 0
      %796 = vmatpush1.bf16.msra.mxu0 %v774
      %797 = vmatprep.subr.bf16.mxu0 0
      %798 = vmatpush1.bf16.msra.mxu0 %v773
      %799 = vmatprep.subr.bf16.mxu0 0
      %800 = vmatpush1.bf16.msra.mxu0 %v772
      %801 = vmatprep.subr.bf16.mxu0 0
      %802 = vmatpush1.bf16.msra.mxu0 %v771
      %803 = vmatprep.subr.bf16.mxu0 0
      %804 = vmatpush2.bf16.msra.mxu0 0
      %805 = vmatprep.subr.bf16.mxu0 0
      %806 = vmatpush2.bf16.msra.mxu0 0
      %807 = vmatprep.subr.bf16.mxu0 0
      %808 = vmatpush2.bf16.msra.mxu0 0
      %809 = vmatprep.subr.bf16.mxu0 0
      %810 = vmatpush2.bf16.msra.mxu0 0
      %811 = vmatprep.subr.bf16.mxu0 0
      %812 = vmatpush2.bf16.msra.mxu0 0
      %813 = vmatprep.subr.bf16.mxu0 0
      %814 = vmatpush2.bf16.msra.mxu0 0
      %815 = vmatprep.subr.bf16.mxu0 0
      %816 = vmatpush2.bf16.msra.mxu0 0
      %817 = vmatprep.subr.bf16.mxu0 0
      %818 = vmatpush2.bf16.msra.mxu0 0
      %819 = vmatprep.mubr.bf16.mxu0 0
      %820 = vmatmul.mubr.bf16.gmra.mxu0 %v737
      %v821 = vpop.f32.mrf.mxu0
      %v822 = vadd.f32 0.0, %v821
      %v823 = vpop.f32.mrf.mxu0
      %v824 = vpop.f32.mrf.mxu0
      %v825 = vadd.f32 0.0, %v824
      %v826 = vpop.f32.mrf.mxu0
      %827 = vdwg.mxu0
      %v844 = vunpack.c.l.b16 %v699
      %v845 = vunpack.c.l.b16 %v700
      %v846 = vunpack.c.l.b16 %v701
      %v847 = vunpack.c.l.b16 %v702
      %v848 = vunpack.c.l.b16 %v703
      %v849 = vunpack.c.l.b16 %v704
      %v850 = vunpack.c.l.b16 %v705
      %v851 = vunpack.c.l.b16 %v706
      %v852 = vunpack.c.l.b16 %v707
      %v853 = vunpack.c.l.b16 %v708
      %v854 = vunpack.c.l.b16 %v709
      %v855 = vunpack.c.l.b16 %v710
      %v856 = vunpack.c.l.b16 %v711
      %v857 = vunpack.c.l.b16 %v712
      %v858 = vunpack.c.l.b16 %v713
      %v859 = vunpack.c.l.b16 %v714
      %v860 = vpack.c.b16 %v845, %v844
      %v861 = vpack.c.b16 %v847, %v846
      %v862 = vpack.c.b16 %v849, %v848
      %v863 = vpack.c.b16 %v851, %v850
      %v864 = vpack.c.b16 %v853, %v852
      %v865 = vpack.c.b16 %v855, %v854
      %v866 = vpack.c.b16 %v857, %v856
      %v867 = vpack.c.b16 %v859, %v858
      %876 = vmatprep.subr.bf16.mxu0 0
      %877 = vmatpush1.bf16.msra.mxu0 %v867
      %878 = vmatprep.subr.bf16.mxu0 0
      %879 = vmatpush1.bf16.msra.mxu0 %v866
      %880 = vmatprep.subr.bf16.mxu0 0
      %881 = vmatpush1.bf16.msra.mxu0 %v865
      %882 = vmatprep.subr.bf16.mxu0 0
      %883 = vmatpush1.bf16.msra.mxu0 %v864
      %884 = vmatprep.subr.bf16.mxu0 0
      %885 = vmatpush1.bf16.msra.mxu0 %v863
      %886 = vmatprep.subr.bf16.mxu0 0
      %887 = vmatpush1.bf16.msra.mxu0 %v862
      %888 = vmatprep.subr.bf16.mxu0 0
      %889 = vmatpush1.bf16.msra.mxu0 %v861
      %890 = vmatprep.subr.bf16.mxu0 0
      %891 = vmatpush1.bf16.msra.mxu0 %v860
      %892 = vmatprep.subr.bf16.mxu0 0
      %893 = vmatpush2.bf16.msra.mxu0 0
      %894 = vmatprep.subr.bf16.mxu0 0
      %895 = vmatpush2.bf16.msra.mxu0 0
      %896 = vmatprep.subr.bf16.mxu0 0
      %897 = vmatpush2.bf16.msra.mxu0 0
      %898 = vmatprep.subr.bf16.mxu0 0
      %899 = vmatpush2.bf16.msra.mxu0 0
      %900 = vmatprep.subr.bf16.mxu0 0
      %901 = vmatpush2.bf16.msra.mxu0 0
      %902 = vmatprep.subr.bf16.mxu0 0
      %903 = vmatpush2.bf16.msra.mxu0 0
      %904 = vmatprep.subr.bf16.mxu0 0
      %905 = vmatpush2.bf16.msra.mxu0 0
      %906 = vmatprep.subr.bf16.mxu0 0
      %907 = vmatpush2.bf16.msra.mxu0 0
      %908 = vmatprep.mubr.bf16.mxu0 0
      %909 = vmatmul.mubr.bf16.gmra.mxu0 %v665
      %v910 = vpop.f32.mrf.mxu0
      %v911 = vadd.f32 %v822, %v910
      %v912 = vpop.f32.mrf.mxu0
      %v913 = vpop.f32.mrf.mxu0
      %v914 = vadd.f32 %v825, %v913
      %v915 = vpop.f32.mrf.mxu0
      %916 = vdwg.mxu0
      %v917 = vld [vmem:[#allocation3] sm:$0xe]
      %v918 = vld [vmem:[#allocation3 + $0x4] sm:$0xf]
      %v919 = vld [vmem:[#allocation3 + $0x8] sm:$0x1]
      %s920 = scalar_lea.vmem %s3, 128
      %v921 = vld [vmem:[%s920] sm:$0xf]
      %v922 = vld [vmem:[%s920 + $0x4] sm:$0xf]
      %v923 = vld [vmem:[%s920 + $0x8] sm:$0xf]
      %v924 = vld [vmem:[%s920 + $0xc] sm:$0xf]
      %v925 = vld [vmem:[%s920 + $0x10] sm:$0xf]
      %v926 = vld [vmem:[%s920 + $0x14] sm:$0xf]
      %v927 = vld [vmem:[%s920 + $0x18] sm:$0xf]
      %v928 = vld [vmem:[%s920 + $0x1c] sm:$0xf]
      %v929 = vld [vmem:[%s920 + $0x20] sm:$0xf]
      %v930 = vld [vmem:[%s920 + $0x24] sm:$0xf]
      %v931 = vld [vmem:[%s920 + $0x28] sm:$0xf]
      %v932 = vld [vmem:[%s920 + $0x2c] sm:$0xf]
      %v933 = vld [vmem:[%s920 + $0x30] sm:$0xf]
      %v934 = vld [vmem:[%s920 + $0x34] sm:$0xf]
      %v935 = vld [vmem:[%s920 + $0x38] sm:$0xf]
      %v936 = vld [vmem:[%s920 + $0x3c] sm:$0xf]
      %v940 = vunpack.c.l.b16 %v917
      %v941 = vunpack.c.l.b16 %v918
      %v942 = vunpack.c.l.b16 %v919
      %v943 = vpack.c.b16 %v941, %v940
      %v944 = vpack.c.b16 %v942, %v942
      %v945 = vrot.slane %v943, 1
      %v946 = vrot.slane %v944, 1
      %v947 = vsel %vm554, %v945, %v946
      %v965 = vunpack.c.l.b16 %v921
      %v966 = vunpack.c.l.b16 %v922
      %v967 = vunpack.c.l.b16 %v923
      %v968 = vunpack.c.l.b16 %v924
      %v969 = vunpack.c.l.b16 %v925
      %v970 = vunpack.c.l.b16 %v926
      %v971 = vunpack.c.l.b16 %v927
      %v972 = vunpack.c.l.b16 %v928
      %v973 = vunpack.c.l.b16 %v929
      %v974 = vunpack.c.l.b16 %v930
      %v975 = vunpack.c.l.b16 %v931
      %v976 = vunpack.c.l.b16 %v932
      %v977 = vunpack.c.l.b16 %v933
      %v978 = vunpack.c.l.b16 %v934
      %v979 = vunpack.c.l.b16 %v935
      %v980 = vunpack.c.l.b16 %v936
      %v981 = vpack.c.b16 %v966, %v965
      %v982 = vpack.c.b16 %v968, %v967
      %v983 = vpack.c.b16 %v970, %v969
      %v984 = vpack.c.b16 %v972, %v971
      %v985 = vpack.c.b16 %v974, %v973
      %v986 = vpack.c.b16 %v976, %v975
      %v987 = vpack.c.b16 %v978, %v977
      %v988 = vpack.c.b16 %v980, %v979
      %997 = vmatprep.subr.bf16.mxu0 0
      %998 = vmatpush1.bf16.msra.mxu0 %v988
      %999 = vmatprep.subr.bf16.mxu0 0
      %1000 = vmatpush1.bf16.msra.mxu0 %v987
      %1001 = vmatprep.subr.bf16.mxu0 0
      %1002 = vmatpush1.bf16.msra.mxu0 %v986
      %1003 = vmatprep.subr.bf16.mxu0 0
      %1004 = vmatpush1.bf16.msra.mxu0 %v985
      %1005 = vmatprep.subr.bf16.mxu0 0
      %1006 = vmatpush1.bf16.msra.mxu0 %v984
      %1007 = vmatprep.subr.bf16.mxu0 0
      %1008 = vmatpush1.bf16.msra.mxu0 %v983
      %1009 = vmatprep.subr.bf16.mxu0 0
      %1010 = vmatpush1.bf16.msra.mxu0 %v982
      %1011 = vmatprep.subr.bf16.mxu0 0
      %1012 = vmatpush1.bf16.msra.mxu0 %v981
      %1013 = vmatprep.subr.bf16.mxu0 0
      %1014 = vmatpush2.bf16.msra.mxu0 0
      %1015 = vmatprep.subr.bf16.mxu0 0
      %1016 = vmatpush2.bf16.msra.mxu0 0
      %1017 = vmatprep.subr.bf16.mxu0 0
      %1018 = vmatpush2.bf16.msra.mxu0 0
      %1019 = vmatprep.subr.bf16.mxu0 0
      %1020 = vmatpush2.bf16.msra.mxu0 0
      %1021 = vmatprep.subr.bf16.mxu0 0
      %1022 = vmatpush2.bf16.msra.mxu0 0
      %1023 = vmatprep.subr.bf16.mxu0 0
      %1024 = vmatpush2.bf16.msra.mxu0 0
      %1025 = vmatprep.subr.bf16.mxu0 0
      %1026 = vmatpush2.bf16.msra.mxu0 0
      %1027 = vmatprep.subr.bf16.mxu0 0
      %1028 = vmatpush2.bf16.msra.mxu0 0
      %1029 = vmatprep.mubr.bf16.mxu0 0
      %1030 = vmatmul.mubr.bf16.gmra.mxu0 %v947
      %v1031 = vpop.f32.mrf.mxu0
      %v1032 = vadd.f32 0.0, %v1031
      %v1033 = vpop.f32.mrf.mxu0
      %v1034 = vpop.f32.mrf.mxu0
      %v1035 = vadd.f32 0.0, %v1034
      %v1036 = vpop.f32.mrf.mxu0
      %1037 = vdwg.mxu0
      %v1038 = vadd.f32 %v911, %v1032
      %v1039 = vadd.f32 %v914, %v1035
      %v1040 = vld [vmem:[%s4] sm:$0x1]
      %v1042 = vlaneseq
      %v1043 = vshrl.u32 %v1042, 7
      %v1044 = vsub.s32 0, %v1043
      %v1045 = vrot.slane %v1040, %v1044
      %v1047 = vadd.f32 %v1038, %v1045
      %v1048 = vadd.f32 %v1039, %v1045
      %v1049 = vld [vmem:[%s246] sm:$0xf]
      %v1050 = vld [vmem:[%s246 + $0x4] sm:$0xf]
      %v1051 = vld [vmem:[%s5] sm:$0xf]
      %v1052 = vld [vmem:[%s5 + $0x4] sm:$0xf]
      %v1053 = vld [vmem:[%s5 + $0x8] sm:$0xf]
      %v1054 = vld [vmem:[%s5 + $0xc] sm:$0xf]
      %v1055 = vld [vmem:[%s5 + $0x10] sm:$0xf]
      %v1056 = vld [vmem:[%s5 + $0x14] sm:$0xf]
      %v1057 = vld [vmem:[%s5 + $0x18] sm:$0xf]
      %v1058 = vld [vmem:[%s5 + $0x1c] sm:$0xf]
      %v1059 = vld [vmem:[%s5 + $0x20] sm:$0xf]
      %v1060 = vld [vmem:[%s5 + $0x24] sm:$0xf]
      %v1061 = vld [vmem:[%s5 + $0x28] sm:$0xf]
      %v1062 = vld [vmem:[%s5 + $0x2c] sm:$0xf]
      %v1063 = vld [vmem:[%s5 + $0x30] sm:$0xf]
      %v1064 = vld [vmem:[%s5 + $0x34] sm:$0xf]
      %v1065 = vld [vmem:[%s5 + $0x38] sm:$0xf]
      %v1066 = vld [vmem:[%s5 + $0x3c] sm:$0xf]
      %v1069 = vunpack.c.l.b16 %v1049
      %v1070 = vunpack.c.l.b16 %v1050
      %v1071 = vpack.c.b16 %v1070, %v1069
      %v1089 = vunpack.c.l.b16 %v1051
      %v1090 = vunpack.c.l.b16 %v1052
      %v1091 = vunpack.c.l.b16 %v1053
      %v1092 = vunpack.c.l.b16 %v1054
      %v1093 = vunpack.c.l.b16 %v1055
      %v1094 = vunpack.c.l.b16 %v1056
      %v1095 = vunpack.c.l.b16 %v1057
      %v1096 = vunpack.c.l.b16 %v1058
      %v1097 = vunpack.c.l.b16 %v1059
      %v1098 = vunpack.c.l.b16 %v1060
      %v1099 = vunpack.c.l.b16 %v1061
      %v1100 = vunpack.c.l.b16 %v1062
      %v1101 = vunpack.c.l.b16 %v1063
      %v1102 = vunpack.c.l.b16 %v1064
      %v1103 = vunpack.c.l.b16 %v1065
      %v1104 = vunpack.c.l.b16 %v1066
      %v1105 = vpack.c.b16 %v1090, %v1089
      %v1106 = vpack.c.b16 %v1092, %v1091
      %v1107 = vpack.c.b16 %v1094, %v1093
      %v1108 = vpack.c.b16 %v1096, %v1095
      %v1109 = vpack.c.b16 %v1098, %v1097
      %v1110 = vpack.c.b16 %v1100, %v1099
      %v1111 = vpack.c.b16 %v1102, %v1101
      %v1112 = vpack.c.b16 %v1104, %v1103
      %1121 = vmatprep.subr.bf16.mxu0 0
      %1122 = vmatpush1.bf16.msra.mxu0 %v1112
      %1123 = vmatprep.subr.bf16.mxu0 0
      %1124 = vmatpush1.bf16.msra.mxu0 %v1111
      %1125 = vmatprep.subr.bf16.mxu0 0
      %1126 = vmatpush1.bf16.msra.mxu0 %v1110
      %1127 = vmatprep.subr.bf16.mxu0 0
      %1128 = vmatpush1.bf16.msra.mxu0 %v1109
      %1129 = vmatprep.subr.bf16.mxu0 0
      %1130 = vmatpush1.bf16.msra.mxu0 %v1108
      %1131 = vmatprep.subr.bf16.mxu0 0
      %1132 = vmatpush1.bf16.msra.mxu0 %v1107
      %1133 = vmatprep.subr.bf16.mxu0 0
      %1134 = vmatpush1.bf16.msra.mxu0 %v1106
      %1135 = vmatprep.subr.bf16.mxu0 0
      %1136 = vmatpush1.bf16.msra.mxu0 %v1105
      %1137 = vmatprep.subr.bf16.mxu0 0
      %1138 = vmatpush2.bf16.msra.mxu0 0
      %1139 = vmatprep.subr.bf16.mxu0 0
      %1140 = vmatpush2.bf16.msra.mxu0 0
      %1141 = vmatprep.subr.bf16.mxu0 0
      %1142 = vmatpush2.bf16.msra.mxu0 0
      %1143 = vmatprep.subr.bf16.mxu0 0
      %1144 = vmatpush2.bf16.msra.mxu0 0
      %1145 = vmatprep.subr.bf16.mxu0 0
      %1146 = vmatpush2.bf16.msra.mxu0 0
      %1147 = vmatprep.subr.bf16.mxu0 0
      %1148 = vmatpush2.bf16.msra.mxu0 0
      %1149 = vmatprep.subr.bf16.mxu0 0
      %1150 = vmatpush2.bf16.msra.mxu0 0
      %1151 = vmatprep.subr.bf16.mxu0 0
      %1152 = vmatpush2.bf16.msra.mxu0 0
      %1153 = vmatprep.mubr.bf16.mxu0 0
      %1154 = vmatmul.mubr.bf16.gmra.mxu0 %v1071
      %v1155 = vpop.f32.mrf.mxu0
      %v1156 = vadd.f32 %v1047, %v1155
      %v1157 = vpop.f32.mrf.mxu0
      %v1158 = vpop.f32.mrf.mxu0
      %v1159 = vadd.f32 %v1048, %v1158
      %v1160 = vpop.f32.mrf.mxu0
      %1161 = vdwg.mxu0
      %1162 = vst [vmem:[%s251] sm:$0xff] %v1156
      %1163 = vst [vmem:[%s251 + $0x8] sm:$0xff] %v1159
      %p1164 = scmp.lt.s32.totalorder %s17, 1
      %s1165 = scalar_select %p1164, %s17, 1
      %s1166 = smul.addr %s1165, 2
      %s1167 = smul.addr %s1166, 8
      %s1168 = scalar_lea.vmem %s6, %s1167
      // Predicated region
      $region45: #{_resnet_block_fwd.1} parent=43 // pred_check
        %p1169 = pneg %p166
      $region46: #{_resnet_block_fwd.1} parent=43 // pred_check_branch
        %1171 = sbr.rel (%p1169) target = $region48
      $region47: #{_resnet_block_fwd.1} parent=43 // pred_region
        _
      $region48: #{_resnet_block_fwd.1} parent=43 // pred_fallthru
        _
    $region44: #{_resnet_block_fwd.1} parent=5 // pred_fallthru
      _
    %p1172 = scmp.le.s32.totalorder 2, %s12
    // Predicated region
    $region49: #{_resnet_block_fwd.1} parent=5 // pred_check
      %p1173 = pneg %p1172
    $region50: #{_resnet_block_fwd.1} parent=5 // pred_check_branch
      %1175 = sbr.rel (%p1173) target = $region52
    $region51: #{_resnet_block_fwd.1} parent=5 // pred_region
      %s1176 = ssub.s32 %s12, 2
      // Predicated region
      $region53: #{_resnet_block_fwd.1} parent=51 // pred_check
        %p1177 = pneg %p172
      $region54: #{_resnet_block_fwd.1} parent=51 // pred_check_branch
        %1179 = sbr.rel (%p1177) target = $region56
      $region55: #{_resnet_block_fwd.1} parent=51 // pred_region
        %p1180 = scmp.lt.s32.totalorder %s18, 1
        %s1181 = scalar_select %p1180, %s18, 1
        %s1182 = smul.addr %s1181, 2
        %s1183 = smul.addr %s1182, 8
        %s1184 = scalar_lea.vmem %s6, %s1183
      $region56: #{_resnet_block_fwd.1} parent=51 // pred_fallthru
        _
    $region52: #{_resnet_block_fwd.1} parent=5 // pred_fallthru
      _
  $region6: #{_resnet_block_fwd.1} parent=0 // loop_footer
    %s16 = sadd.s32 1, %s12
  $region7: #{_resnet_block_fwd.1} parent=0 // loop_footer_branch
    %11 = sbr.rel target = $region3
  $region8: #{_resnet_block_fwd.1} parent=0 // loop_exit
    _

</llo_original>
